<compile_context>
chip_gen: v7x
topology: tpu7x:2x2x1
jax: 0.10.0
libtpu: 0.0.40
codegen_flags: <defaults>
</compile_context>

<pallas_src>
import jax
import jax.numpy as jnp
from jax.experimental import pallas as pl
from jax.experimental.pallas import tpu as pltpu


def value_function_kernel(x_ref, w1_ref, b1_ref, w2_ref, b2_ref,
                          w3_ref, b3_ref, o_ref):
    # Encoder layer 1: bf16 x bf16 matmul on the MXU, f32 accumulation,
    # bias + ReLU in f32 on the VPU.
    h1 = jnp.dot(x_ref[...], w1_ref[...], preferred_element_type=jnp.float32)
    h1 = jnp.maximum(h1 + b1_ref[...], 0.0)

    # Encoder layer 2: cast the activation to bf16 only at the matmul input.
    h2 = jnp.dot(h1.astype(w2_ref.dtype), w2_ref[...],
                 preferred_element_type=jnp.float32)
    h2 = jnp.maximum(h2 + b2_ref[...], 0.0)

    # Value head Linear(feature_size, 1): an N=1 MXU matmul wastes 127/255
    # output columns, so do it as a VPU multiply + XLU lane reduction instead.
    v = jnp.sum(h2 * w3_ref[...], axis=-1, keepdims=True) + b3_ref[...]  # (TB, 1)

    # Lane-dense store: output block is (1, TB) (batch on the lane axis).
    o_ref[...] = jnp.transpose(v).astype(o_ref.dtype)


def value_function_forward(x, params, *, tb=128):
    """ValueFunction forward in a single batch-tiled Pallas kernel.

    x: (B, obs_dim) float32
    params: dict of
        w1 (obs_dim, H1), b1 (1, H1),
        w2 (H1, H2),      b2 (1, H2),
        w3 (1, H2),       b3 (1, 1)     # fc.weight / fc.bias layout
    returns: (B, 1) float32
    """
    B, obs_dim = x.shape
    w1, b1 = params["w1"], params["b1"]
    w2, b2 = params["w2"], params["b2"]
    w3, b3 = params["w3"], params["b3"]

    # Batch tile: multiple of 8 (sublanes); 128 keeps the output store fully
    # lane-dense. Small batches collapse to a single full block.
    if B <= tb:
        tb = B
    grid = (pl.cdiv(B, tb),)

    # bf16 matmul operands (MXU-native on v6e/v7x, halves HBM/VMEM traffic);
    # biases and the value-head weight stay f32 (pure VPU work).
    x_bf = x.astype(jnp.bfloat16)
    w1_bf = w1.astype(jnp.bfloat16)
    w2_bf = w2.astype(jnp.bfloat16)

    def resident(shape):
        # Constant index_map -> the block never changes across grid steps, so
        # Pallas keeps these weights/biases resident in VMEM.
        return pl.BlockSpec(shape, lambda i: (0,) * len(shape))

    out = pl.pallas_call(
        value_function_kernel,
        out_shape=jax.ShapeDtypeStruct((1, B), jnp.float32),
        grid=grid,
        in_specs=[
            pl.BlockSpec((tb, obs_dim), lambda i: (i, 0)),   # streamed x tiles
            resident(w1_bf.shape), resident(b1.shape),
            resident(w2_bf.shape), resident(b2.shape),
            resident(w3.shape), resident(b3.shape),
        ],
        # Lane-dense output row; wrapper reshapes (1, B) -> (B, 1).
        out_specs=pl.BlockSpec((1, tb), lambda i: (0, i)),
        compiler_params=pltpu.CompilerParams(
            # Batch tiles are independent -> shard across TCs on v7x megacore.
            dimension_semantics=("parallel",)),
    )(x_bf, w1_bf, b1, w2_bf, b2, w3, b3)

    return out.reshape(B, 1)


def init_params(key, obs_dim, hidden1, hidden2):
    """Deterministic parameter init (shapes follow the nn.Linear layers)."""
    k1, k2, k3, k4, k5, k6 = jax.random.split(key, 6)
    scale = 0.1
    return {
        "w1": scale * jax.random.normal(k1, (obs_dim, hidden1), jnp.float32),
        "b1": scale * jax.random.normal(k2, (1, hidden1), jnp.float32),
        "w2": scale * jax.random.normal(k3, (hidden1, hidden2), jnp.float32),
        "b2": scale * jax.random.normal(k4, (1, hidden2), jnp.float32),
        "w3": scale * jax.random.normal(k5, (1, hidden2), jnp.float32),
        "b3": scale * jax.random.normal(k6, (1, 1), jnp.float32),
    }


def reference_forward(x, p):
    """Pure-JAX reference mirroring the kernel's bf16-input / f32-accum math."""
    xf = x.astype(jnp.bfloat16).astype(jnp.float32)
    w1f = p["w1"].astype(jnp.bfloat16).astype(jnp.float32)
    w2f = p["w2"].astype(jnp.bfloat16).astype(jnp.float32)
    h1 = jnp.maximum(xf @ w1f + p["b1"], 0.0)
    h1b = h1.astype(jnp.bfloat16).astype(jnp.float32)
    h2 = jnp.maximum(h1b @ w2f + p["b2"], 0.0)
    return jnp.sum(h2 * p["w3"], axis=-1, keepdims=True) + p["b3"]


if __name__ == "__main__":
    key = jax.random.PRNGKey(0)
    k_x, k_p = jax.random.split(key)

    # Small but tiling-exercising shapes: 2 batch tiles of 128, d3rlpy-default
    # 256-wide hidden layers, 32-d flat observations.
    batch, obs_dim, hidden1, hidden2 = 256, 32, 256, 256
    x = jax.random.normal(k_x, (batch, obs_dim), jnp.float32)
    params = init_params(k_p, obs_dim, hidden1, hidden2)

    v = value_function_forward(x, params, tb=128)
    v = jax.block_until_ready(v)

    v_ref = reference_forward(x, params)
    assert v.shape == (batch, 1)
    assert jnp.allclose(v, v_ref, atol=1e-3, rtol=1e-3), (
        float(jnp.max(jnp.abs(v - v_ref))))

    print("KERNEL_OK")
</pallas_src>

<mosaic_0001>
module attributes {stable_mosaic.version = 11 : i64} {
  func.func @value_function_kernel(%arg0: i32, %arg1: memref<128x32xbf16, #tpu.memory_space<vmem>>, %arg2: memref<32x256xbf16, #tpu.memory_space<vmem>>, %arg3: memref<1x256xf32, #tpu.memory_space<vmem>>, %arg4: memref<256x256xbf16, #tpu.memory_space<vmem>>, %arg5: memref<1x256xf32, #tpu.memory_space<vmem>>, %arg6: memref<1x256xf32, #tpu.memory_space<vmem>>, %arg7: memref<1x1xf32, #tpu.memory_space<vmem>>, %arg8: memref<1x128xf32, #tpu.memory_space<vmem>>) attributes {dimension_semantics = [#tpu.dimension_semantics<parallel>], iteration_bounds = array<i64: 2>, scalar_prefetch = 0 : i64, scratch_operands = 0 : i64, tpu.core_type = #tpu.core_type<tc>, window_params = [{transform_indices = @transform_0, window_bounds = array<i64: 128, 32>}, {pipeline_mode = #tpu.pipeline_mode<synchronous>, transform_indices = @transform_1, window_bounds = array<i64: 32, 256>}, {pipeline_mode = #tpu.pipeline_mode<synchronous>, transform_indices = @transform_2, window_bounds = array<i64: 1, 256>}, {pipeline_mode = #tpu.pipeline_mode<synchronous>, transform_indices = @transform_3, window_bounds = array<i64: 256, 256>}, {pipeline_mode = #tpu.pipeline_mode<synchronous>, transform_indices = @transform_4, window_bounds = array<i64: 1, 256>}, {pipeline_mode = #tpu.pipeline_mode<synchronous>, transform_indices = @transform_5, window_bounds = array<i64: 1, 256>}, {pipeline_mode = #tpu.pipeline_mode<synchronous>, transform_indices = @transform_6, window_bounds = array<i64: 1, 1>}, {transform_indices = @transform_7, window_bounds = array<i64: 1, 128>}]} {
    %c0 = arith.constant 0 : index
    %c0_0 = arith.constant 0 : index
    %0 = vector.load %arg1[%c0, %c0_0] : memref<128x32xbf16, #tpu.memory_space<vmem>>, vector<128x32xbf16>
    %c0_1 = arith.constant 0 : index
    %c0_2 = arith.constant 0 : index
    %1 = vector.load %arg2[%c0_1, %c0_2] : memref<32x256xbf16, #tpu.memory_space<vmem>>, vector<32x256xbf16>
    %cst = arith.constant dense<0.000000e+00> : vector<128x256xf32>
    %2 = tpu.matmul %0, %1, %cst {dimension_numbers = #tpu.dot_dimension_numbers<[1], [0], [0], [1], [0, 0, 1, 1], [], []>} : vector<128x32xbf16>, vector<32x256xbf16>, vector<128x256xf32> -> vector<128x256xf32>
    %c0_3 = arith.constant 0 : index
    %c0_4 = arith.constant 0 : index
    %3 = vector.load %arg3[%c0_3, %c0_4] : memref<1x256xf32, #tpu.memory_space<vmem>>, vector<1x256xf32>
    %4 = vector.broadcast %3 : vector<1x256xf32> to vector<128x256xf32>
    %5 = arith.addf %2, %4 : vector<128x256xf32>
    %cst_5 = arith.constant 0.000000e+00 : f32
    %6 = vector.broadcast %cst_5 : f32 to vector<128x256xf32>
    %7 = arith.maximumf %5, %6 : vector<128x256xf32>
    %8 = arith.truncf %7 : vector<128x256xf32> to vector<128x256xbf16>
    %c0_6 = arith.constant 0 : index
    %c0_7 = arith.constant 0 : index
    %9 = vector.load %arg4[%c0_6, %c0_7] : memref<256x256xbf16, #tpu.memory_space<vmem>>, vector<256x256xbf16>
    %cst_8 = arith.constant dense<0.000000e+00> : vector<128x256xf32>
    %10 = tpu.matmul %8, %9, %cst_8 {dimension_numbers = #tpu.dot_dimension_numbers<[1], [0], [0], [1], [0, 0, 1, 1], [], []>} : vector<128x256xbf16>, vector<256x256xbf16>, vector<128x256xf32> -> vector<128x256xf32>
    %c0_9 = arith.constant 0 : index
    %c0_10 = arith.constant 0 : index
    %11 = vector.load %arg5[%c0_9, %c0_10] : memref<1x256xf32, #tpu.memory_space<vmem>>, vector<1x256xf32>
    %12 = vector.broadcast %11 : vector<1x256xf32> to vector<128x256xf32>
    %13 = arith.addf %10, %12 : vector<128x256xf32>
    %cst_11 = arith.constant 0.000000e+00 : f32
    %14 = vector.broadcast %cst_11 : f32 to vector<128x256xf32>
    %15 = arith.maximumf %13, %14 : vector<128x256xf32>
    %c0_12 = arith.constant 0 : index
    %c0_13 = arith.constant 0 : index
    %16 = vector.load %arg6[%c0_12, %c0_13] : memref<1x256xf32, #tpu.memory_space<vmem>>, vector<1x256xf32>
    %17 = vector.broadcast %16 : vector<1x256xf32> to vector<128x256xf32>
    %18 = arith.mulf %15, %17 : vector<128x256xf32>
    %cst_14 = arith.constant dense<0.000000e+00> : vector<128xf32>
    %19 = vector.multi_reduction <add>, %18, %cst_14 [1] : vector<128x256xf32> to vector<128xf32>
    %20 = vector.shape_cast %19 : vector<128xf32> to vector<128x1xf32>
    %c0_15 = arith.constant 0 : index
    %c0_16 = arith.constant 0 : index
    %21 = vector.load %arg7[%c0_15, %c0_16] : memref<1x1xf32, #tpu.memory_space<vmem>>, vector<1x1xf32>
    %22 = vector.broadcast %21 : vector<1x1xf32> to vector<128x1xf32>
    %23 = arith.addf %20, %22 : vector<128x1xf32>
    %24 = tpu.transpose %23, [1, 0] : vector<128x1xf32> -> vector<1x128xf32>
    %c0_17 = arith.constant 0 : index
    %c0_18 = arith.constant 0 : index
    %25 = vector.load %arg8[%c0_17, %c0_18] : memref<1x128xf32, #tpu.memory_space<vmem>>, vector<1x128xf32>
    tpu.vector_store %arg8[%c0_17, %c0_18], %24 {strides = array<i32>} : memref<1x128xf32, #tpu.memory_space<vmem>>, vector<1x128xf32>,
    return
  }
  func.func @transform_0(%arg0: i32) -> (i32, i32) {
    %c0_i32 = arith.constant 0 : i32
    %c0_i32_0 = arith.constant 0 : i32
    return %arg0, %c0_i32 : i32, i32
  }
  func.func @transform_1(%arg0: i32) -> (i32, i32) {
    %c0_i32 = arith.constant 0 : i32
    %c0_i32_0 = arith.constant 0 : i32
    %c0_i32_1 = arith.constant 0 : i32
    return %c0_i32, %c0_i32_0 : i32, i32
  }
  func.func @transform_2(%arg0: i32) -> (i32, i32) {
    %c0_i32 = arith.constant 0 : i32
    %c0_i32_0 = arith.constant 0 : i32
    %c0_i32_1 = arith.constant 0 : i32
    return %c0_i32, %c0_i32_0 : i32, i32
  }
  func.func @transform_3(%arg0: i32) -> (i32, i32) {
    %c0_i32 = arith.constant 0 : i32
    %c0_i32_0 = arith.constant 0 : i32
    %c0_i32_1 = arith.constant 0 : i32
    return %c0_i32, %c0_i32_0 : i32, i32
  }
  func.func @transform_4(%arg0: i32) -> (i32, i32) {
    %c0_i32 = arith.constant 0 : i32
    %c0_i32_0 = arith.constant 0 : i32
    %c0_i32_1 = arith.constant 0 : i32
    return %c0_i32, %c0_i32_0 : i32, i32
  }
  func.func @transform_5(%arg0: i32) -> (i32, i32) {
    %c0_i32 = arith.constant 0 : i32
    %c0_i32_0 = arith.constant 0 : i32
    %c0_i32_1 = arith.constant 0 : i32
    return %c0_i32, %c0_i32_0 : i32, i32
  }
  func.func @transform_6(%arg0: i32) -> (i32, i32) {
    %c0_i32 = arith.constant 0 : i32
    %c0_i32_0 = arith.constant 0 : i32
    %c0_i32_1 = arith.constant 0 : i32
    return %c0_i32, %c0_i32_0 : i32, i32
  }
  func.func @transform_7(%arg0: i32) -> (i32, i32) {
    %c0_i32 = arith.constant 0 : i32
    %c0_i32_0 = arith.constant 0 : i32
    return %c0_i32, %arg0 : i32, i32
  }
}

</mosaic_0001>

<llo_original>
// kernel: tpu_custom_call.1
$region0: #{tpu_custom_call.1}
  #allocation0 [shape = 'u32[]', space=smem, size = 0x4, offset = 0x4, fixed_abs, tag = 'smem constant byte address 0x4 - core index']
  #allocation1 [shape = 'u32[144,128]{1,0:T(1,128)}', space=vmem, size = 0x12000, scoped, tag = 'internal scratch']
  #allocation2 [shape = 'f32[1,1]{1,0:T(1,128)S(1)}', space=vmem, size = 0x200, scoped, tag = 'scoped memory for tpu_custom_call.1']
  %s0 = inlined_call_operand.vmem [shape: bf16[256,32], index: 0, kind: input, shape index: {}]
  %s1 = inlined_call_operand.vmem [shape: bf16[32,256], index: 1, kind: input, shape index: {}]
  %s2 = inlined_call_operand.vmem [shape: f32[1,256], index: 2, kind: input, shape index: {}]
  %s3 = inlined_call_operand.hbm [shape: bf16[256,256], index: 3, kind: input, shape index: {}]
  %s4 = inlined_call_operand.vmem [shape: f32[1,256], index: 4, kind: input, shape index: {}]
  %s5 = inlined_call_operand.vmem [shape: f32[1,256], index: 5, kind: input, shape index: {}]
  %s6 = inlined_call_operand.<no memory space> [shape: f32[1,1], index: 6, kind: input, shape index: {}]
  %s7 = inlined_call_operand.hbm [shape: f32[1,256], index: 7, kind: output, shape index: {}]
  %s8 = sld [smem:[#allocation0]]
  $region65: #{tpu_custom_call.1} parent=0
    _
  %s10 = ssub.s32 1, %s8
  %s11 = scalar_select 0, %s10, %s8
  %v12 = vstv %s6
  %13 = vst [vmem:[#allocation2] sm:$0x1] %v12
  $region1: #{tpu_custom_call.1} parent=0
    #allocation3 [shape = 'u8[131072]{0}', space=vmem, size = 0x20000, scoped, tag = 'input window, operand 3, single buffered']
    #allocation4 [shape = 's32[2]{0}', space=sflag, size = 0x8, scoped, tag = 'scoped memory for tpu_custom_call.1']
    #allocation5 [shape = 's32[2]{0}', space=sflag, size = 0x8, scoped, tag = 'scoped memory for tpu_custom_call.1']
    #allocation6 [shape = 'u8[1024]{0}', space=vmem, size = 0x400, scoped, tag = 'output window, operand 0']
    %14 = vsyncpa [#allocation4], 0
    %15 = vsyncpa [#allocation5], 0
    %s16 = scalar_lea.sflag [#allocation5], 1
    %17 = vsyncpa %s16, 0
    loop: start=0, step=1, limit=4
    $region2: #{tpu_custom_call.1} parent=1 // loop_pre_header
      _
    $region3: #{tpu_custom_call.1} parent=1 // loop_header
      %s19 = sphi 0, %s23
      %p20 = scmp.ge.s32.totalorder %s19, 4
      %s29 = sphi 0, %s31
      %s32 = sphi 0, %s29
      %s33 = sphi 0, %s32
      %s49 = sphi 0, %s33
      %s53 = sphi 0, %s53
      %s55 = sphi 0, %s53
      %s56 = sphi 0, %s55
      %s70 = sphi 0, %s56
      %s74 = sphi 0, %s74
      %s76 = sphi 0, %s74
      %s77 = sphi 0, %s76
      %s91 = sphi 0, %s77
      %s95 = sphi 0, %s95
      %s97 = sphi 0, %s95
      %s98 = sphi 0, %s97
      %s112 = sphi 0, %s98
      %s116 = sphi 0, %s116
      %s118 = sphi 0, %s116
      %s119 = sphi 0, %s118
      %s133 = sphi 0, %s119
      %s137 = sphi 0, %s137
      %s139 = sphi 0, %s137
      %s140 = sphi 0, %s139
      %s154 = sphi 0, %s140
      %s158 = sphi 0, %s158
      %s160 = sphi 0, %s158
      %s161 = sphi 0, %s160
      %s175 = sphi 0, %s161
      %s181 = sphi 0, %s183
      %s184 = sphi 0, %s181
      %s185 = sphi 0, %s184
      %s201 = sphi 0, %s185
    $region4: #{tpu_custom_call.1} parent=1 // loop_header_branch
      %22 = sbr.rel (%p20) target = $region8
    $region5: #{tpu_custom_call.1} parent=1 // loop_body
      %s24 = ssub.s32 %s19, 1
      %s25 = ssub.s32 %s19, 2
      %s26 = sadd.s32 %s19, 1
      %s27 = ssub.s32 %s19, %s26
      %p28 = scmp.eq.s32.totalorder %s27, 0
      %s30 = sadd.s32 %s29, 1
      %s31 = scalar_select %p28, %s29, %s30
      %p34 = pneg %p28
      %p35 = scmp.eq.s32.totalorder %s19, 1
      %p36 = por %p34, %p35
      %p37 = scmp.ne.s32.totalorder %s29, %s32
      %p38 = scmp.eq.s32.totalorder %s19, 0
      %p39 = por %p37, %p38
      %p40 = scmp.ne.s32.totalorder %s29, %s32
      %p41 = scmp.eq.s32.totalorder %s24, 1
      %p42 = por %p40, %p41
      %p43 = scmp.ne.s32.totalorder %s32, %s33
      %p44 = scmp.eq.s32.totalorder %s24, 0
      %p45 = por %p43, %p44
      %p46 = scmp.ne.s32.totalorder %s32, %s33
      %p47 = scmp.eq.s32.totalorder %s25, 1
      %p48 = por %p46, %p47
      %p50 = scmp.ne.s32.totalorder %s33, %s49
      %p51 = scmp.eq.s32.totalorder %s25, 0
      %p52 = por %p50, %p51
      %s54 = sadd.s32 %s53, 1
      %p57 = scmp.eq.s32.totalorder %s19, 1
      %p58 = scmp.ne.s32.totalorder %s53, %s55
      %p59 = scmp.eq.s32.totalorder %s19, 0
      %p60 = por %p58, %p59
      %p61 = scmp.ne.s32.totalorder %s53, %s55
      %p62 = scmp.eq.s32.totalorder %s24, 1
      %p63 = por %p61, %p62
      %p64 = scmp.ne.s32.totalorder %s55, %s56
      %p65 = scmp.eq.s32.totalorder %s24, 0
      %p66 = por %p64, %p65
      %p67 = scmp.ne.s32.totalorder %s55, %s56
      %p68 = scmp.eq.s32.totalorder %s25, 1
      %p69 = por %p67, %p68
      %p71 = scmp.ne.s32.totalorder %s56, %s70
      %p72 = scmp.eq.s32.totalorder %s25, 0
      %p73 = por %p71, %p72
      %s75 = sadd.s32 %s74, 1
      %p78 = scmp.eq.s32.totalorder %s19, 1
      %p79 = scmp.ne.s32.totalorder %s74, %s76
      %p80 = scmp.eq.s32.totalorder %s19, 0
      %p81 = por %p79, %p80
      %p82 = scmp.ne.s32.totalorder %s74, %s76
      %p83 = scmp.eq.s32.totalorder %s24, 1
      %p84 = por %p82, %p83
      %p85 = scmp.ne.s32.totalorder %s76, %s77
      %p86 = scmp.eq.s32.totalorder %s24, 0
      %p87 = por %p85, %p86
      %p88 = scmp.ne.s32.totalorder %s76, %s77
      %p89 = scmp.eq.s32.totalorder %s25, 1
      %p90 = por %p88, %p89
      %p92 = scmp.ne.s32.totalorder %s77, %s91
      %p93 = scmp.eq.s32.totalorder %s25, 0
      %p94 = por %p92, %p93
      %s96 = sadd.s32 %s95, 1
      %p99 = scmp.eq.s32.totalorder %s19, 1
      %p100 = scmp.ne.s32.totalorder %s95, %s97
      %p101 = scmp.eq.s32.totalorder %s19, 0
      %p102 = por %p100, %p101
      %p103 = scmp.ne.s32.totalorder %s95, %s97
      %p104 = scmp.eq.s32.totalorder %s24, 1
      %p105 = por %p103, %p104
      %p106 = scmp.ne.s32.totalorder %s97, %s98
      %p107 = scmp.eq.s32.totalorder %s24, 0
      %p108 = por %p106, %p107
      %p109 = scmp.ne.s32.totalorder %s97, %s98
      %p110 = scmp.eq.s32.totalorder %s25, 1
      %p111 = por %p109, %p110
      %p113 = scmp.ne.s32.totalorder %s98, %s112
      %p114 = scmp.eq.s32.totalorder %s25, 0
      %p115 = por %p113, %p114
      %s117 = sadd.s32 %s116, 1
      %p120 = scmp.eq.s32.totalorder %s19, 1
      %p121 = scmp.ne.s32.totalorder %s116, %s118
      %p122 = scmp.eq.s32.totalorder %s19, 0
      %p123 = por %p121, %p122
      %p124 = scmp.ne.s32.totalorder %s116, %s118
      %p125 = scmp.eq.s32.totalorder %s24, 1
      %p126 = por %p124, %p125
      %p127 = scmp.ne.s32.totalorder %s118, %s119
      %p128 = scmp.eq.s32.totalorder %s24, 0
      %p129 = por %p127, %p128
      %p130 = scmp.ne.s32.totalorder %s118, %s119
      %p131 = scmp.eq.s32.totalorder %s25, 1
      %p132 = por %p130, %p131
      %p134 = scmp.ne.s32.totalorder %s119, %s133
      %p135 = scmp.eq.s32.totalorder %s25, 0
      %p136 = por %p134, %p135
      %s138 = sadd.s32 %s137, 1
      %p141 = scmp.eq.s32.totalorder %s19, 1
      %p142 = scmp.ne.s32.totalorder %s137, %s139
      %p143 = scmp.eq.s32.totalorder %s19, 0
      %p144 = por %p142, %p143
      %p145 = scmp.ne.s32.totalorder %s137, %s139
      %p146 = scmp.eq.s32.totalorder %s24, 1
      %p147 = por %p145, %p146
      %p148 = scmp.ne.s32.totalorder %s139, %s140
      %p149 = scmp.eq.s32.totalorder %s24, 0
      %p150 = por %p148, %p149
      %p151 = scmp.ne.s32.totalorder %s139, %s140
      %p152 = scmp.eq.s32.totalorder %s25, 1
      %p153 = por %p151, %p152
      %p155 = scmp.ne.s32.totalorder %s140, %s154
      %p156 = scmp.eq.s32.totalorder %s25, 0
      %p157 = por %p155, %p156
      %s159 = sadd.s32 %s158, 1
      %p162 = scmp.eq.s32.totalorder %s19, 1
      %p163 = scmp.ne.s32.totalorder %s158, %s160
      %p164 = scmp.eq.s32.totalorder %s19, 0
      %p165 = por %p163, %p164
      %p166 = scmp.ne.s32.totalorder %s158, %s160
      %p167 = scmp.eq.s32.totalorder %s24, 1
      %p168 = por %p166, %p167
      %p169 = scmp.ne.s32.totalorder %s160, %s161
      %p170 = scmp.eq.s32.totalorder %s24, 0
      %p171 = por %p169, %p170
      %p172 = scmp.ne.s32.totalorder %s160, %s161
      %p173 = scmp.eq.s32.totalorder %s25, 1
      %p174 = por %p172, %p173
      %p176 = scmp.ne.s32.totalorder %s161, %s175
      %p177 = scmp.eq.s32.totalorder %s25, 0
      %p178 = por %p176, %p177
      %s179 = ssub.s32 %s19, %s26
      %p180 = scmp.eq.s32.totalorder %s179, 0
      %s182 = sadd.s32 %s181, 1
      %s183 = scalar_select %p180, %s181, %s182
      %p186 = pneg %p180
      %p187 = scmp.eq.s32.totalorder %s19, 1
      %p188 = por %p186, %p187
      %p189 = scmp.ne.s32.totalorder %s181, %s184
      %p190 = scmp.eq.s32.totalorder %s19, 0
      %p191 = por %p189, %p190
      %p192 = scmp.ne.s32.totalorder %s181, %s184
      %p193 = scmp.eq.s32.totalorder %s24, 1
      %p194 = por %p192, %p193
      %p195 = scmp.ne.s32.totalorder %s184, %s185
      %p196 = scmp.eq.s32.totalorder %s24, 0
      %p197 = por %p195, %p196
      %p198 = scmp.ne.s32.totalorder %s184, %s185
      %p199 = scmp.eq.s32.totalorder %s25, 1
      %p200 = por %p198, %p199
      %p202 = scmp.ne.s32.totalorder %s185, %s201
      %p203 = scmp.eq.s32.totalorder %s25, 0
      %p204 = por %p202, %p203
      %p205 = scmp.le.s32.totalorder 1, %s19
      %p206 = scmp.lt.s32.totalorder %s19, 3
      %p207 = pnand %p205, %p206
      %p208 = pneg %p207
      // Predicated region
      $region9: #{tpu_custom_call.1} parent=5 // pred_check
        _
      $region10: #{tpu_custom_call.1} parent=5 // pred_check_branch
        %210 = sbr.rel (%p207) target = $region12
      $region11: #{tpu_custom_call.1} parent=5 // pred_region
        %s211 = ssub.s32 %s19, 1
        // Predicated region
        $region13: #{tpu_custom_call.1} parent=11 // pred_check
          %p212 = pneg %p66
        $region14: #{tpu_custom_call.1} parent=11 // pred_check_branch
          %214 = sbr.rel (%p212) target = $region16
        $region15: #{tpu_custom_call.1} parent=11 // pred_region
          _
        $region16: #{tpu_custom_call.1} parent=11 // pred_fallthru
          _
        // Predicated region
        $region17: #{tpu_custom_call.1} parent=11 // pred_check
          %p215 = pneg %p87
        $region18: #{tpu_custom_call.1} parent=11 // pred_check_branch
          %217 = sbr.rel (%p215) target = $region20
        $region19: #{tpu_custom_call.1} parent=11 // pred_region
          _
        $region20: #{tpu_custom_call.1} parent=11 // pred_fallthru
          _
        // Predicated region
        $region21: #{tpu_custom_call.1} parent=11 // pred_check
          %p218 = pneg %p108
        $region22: #{tpu_custom_call.1} parent=11 // pred_check_branch
          %220 = sbr.rel (%p218) target = $region24
        $region23: #{tpu_custom_call.1} parent=11 // pred_region
          %s222 = ssub.s32 4096, 4096
          %223 = vsyncadd [#allocation4], %s222
          %s224 = sshll.u32 [#allocation3], 4
          %s225 = int_to_ptr.vmem [resolvable:$true] %s224
          %230 = dma.hbm_to_vmem [thread:$0]  %s3, 4096, %s225, [#allocation4], 128, 128, 8
        $region24: #{tpu_custom_call.1} parent=11 // pred_fallthru
          _
        // Predicated region
        $region25: #{tpu_custom_call.1} parent=11 // pred_check
          %p231 = pneg %p129
        $region26: #{tpu_custom_call.1} parent=11 // pred_check_branch
          %233 = sbr.rel (%p231) target = $region28
        $region27: #{tpu_custom_call.1} parent=11 // pred_region
          _
        $region28: #{tpu_custom_call.1} parent=11 // pred_fallthru
          _
        // Predicated region
        $region29: #{tpu_custom_call.1} parent=11 // pred_check
          %p234 = pneg %p150
        $region30: #{tpu_custom_call.1} parent=11 // pred_check_branch
          %236 = sbr.rel (%p234) target = $region32
        $region31: #{tpu_custom_call.1} parent=11 // pred_region
          _
        $region32: #{tpu_custom_call.1} parent=11 // pred_fallthru
          _
        // Predicated region
        $region33: #{tpu_custom_call.1} parent=11 // pred_check
          %p237 = pneg %p171
        $region34: #{tpu_custom_call.1} parent=11 // pred_check_branch
          %239 = sbr.rel (%p237) target = $region36
        $region35: #{tpu_custom_call.1} parent=11 // pred_region
          _
        $region36: #{tpu_custom_call.1} parent=11 // pred_fallthru
          _
      $region12: #{tpu_custom_call.1} parent=5 // pred_fallthru
        _
      %p240 = scmp.lt.s32.totalorder %s19, 2
      // Predicated region
      $region37: #{tpu_custom_call.1} parent=5 // pred_check
        %p241 = pneg %p240
      $region38: #{tpu_custom_call.1} parent=5 // pred_check_branch
        %243 = sbr.rel (%p241) target = $region40
      $region39: #{tpu_custom_call.1} parent=5 // pred_region
        // Predicated region
        $region41: #{tpu_custom_call.1} parent=39 // pred_check
          %p244 = pneg %p39
        $region42: #{tpu_custom_call.1} parent=39 // pred_check_branch
          %246 = sbr.rel (%p244) target = $region44
        $region43: #{tpu_custom_call.1} parent=39 // pred_region
          %s247 = smul.u32 16, %s19
          %p248 = scmp.lt.s32.totalorder %s247, 31
          %s249 = scalar_select %p248, %s247, 31
          %s250 = smul.addr %s249, 4
          %s251 = scalar_lea.vmem %s0, %s250
          %s252 = smul.u32 16, %s19
        $region44: #{tpu_custom_call.1} parent=39 // pred_fallthru
          _
      $region40: #{tpu_custom_call.1} parent=5 // pred_fallthru
        _
      %p253 = scmp.le.s32.totalorder 1, %s19
      %p254 = scmp.lt.s32.totalorder %s19, 3
      %p255 = pnand %p253, %p254
      %p256 = pneg %p255
      // Predicated region
      $region45: #{tpu_custom_call.1} parent=5 // pred_check
        _
      $region46: #{tpu_custom_call.1} parent=5 // pred_check_branch
        %258 = sbr.rel (%p255) target = $region48
      $region47: #{tpu_custom_call.1} parent=5 // pred_region
        %s259 = ssub.s32 %s19, 1
        // Predicated region
        $region49: #{tpu_custom_call.1} parent=47 // pred_check
          %p260 = pneg %p108
        $region50: #{tpu_custom_call.1} parent=47 // pred_check_branch
          %262 = sbr.rel (%p260) target = $region52
        $region51: #{tpu_custom_call.1} parent=47 // pred_region
          %263 = dma.done [#allocation4], 4096
        $region52: #{tpu_custom_call.1} parent=47 // pred_fallthru
          _
        %s264 = smul.u32 16, %s24
        %p265 = scmp.lt.s32.totalorder %s264, 31
        %s266 = scalar_select %p265, %s264, 31
        %s267 = smul.addr %s266, 4
        %s268 = scalar_lea.vmem %s0, %s267
        %p269 = pneg %p45
        %p270 = pneg %p42
        %p271 = pneg %p66
        %p272 = pneg %p63
        %p273 = pneg %p87
        %p274 = pneg %p84
        %p275 = pneg %p108
        %p276 = pneg %p105
        %p277 = pneg %p129
        %p278 = pneg %p126
        %p279 = pneg %p150
        %p280 = pneg %p147
        %p281 = pneg %p171
        %p282 = pneg %p168
        %p283 = pneg %p197
        %p284 = pneg %p194
        %s285 = sand.u32 %s184, 1
        %s286 = scalar_lea.sflag [#allocation5], %s285
        %s287 = sand.u32 %s184, 1
        %s288 = scalar_lea.vmem [#allocation6], %s287
        %s289 = smul.u32 16, %s24
        %p290 = scmp.lt.s32.totalorder %s289, 31
        %s291 = scalar_select %p290, %s289, 31
        %s292 = smul.addr %s291, 4
        %s293 = scalar_lea.vmem %s0, %s292
        %s294 = smul.u32 16, %s24
        %v296 = vld [vmem:[%s293] sm:$0xf]
        %v297 = vld [vmem:[%s293 + $0x4] sm:$0xf]
        %v298 = vld [vmem:[%s293 + $0x8] sm:$0xf]
        %v299 = vld [vmem:[%s293 + $0xc] sm:$0xf]
        %v300 = vld [vmem:[%s293 + $0x10] sm:$0xf]
        %v301 = vld [vmem:[%s293 + $0x14] sm:$0xf]
        %v302 = vld [vmem:[%s293 + $0x18] sm:$0xf]
        %v303 = vld [vmem:[%s293 + $0x1c] sm:$0xf]
        %v304 = vld [vmem:[%s293 + $0x20] sm:$0xf]
        %v305 = vld [vmem:[%s293 + $0x24] sm:$0xf]
        %v306 = vld [vmem:[%s293 + $0x28] sm:$0xf]
        %v307 = vld [vmem:[%s293 + $0x2c] sm:$0xf]
        %v308 = vld [vmem:[%s293 + $0x30] sm:$0xf]
        %v309 = vld [vmem:[%s293 + $0x34] sm:$0xf]
        %v310 = vld [vmem:[%s293 + $0x38] sm:$0xf]
        %v311 = vld [vmem:[%s293 + $0x3c] sm:$0xf]
        %v312 = vld [vmem:[%s1] sm:$0xff]
        %v313 = vld [vmem:[%s1 + $0x8] sm:$0xff]
        %v314 = vld [vmem:[%s1 + $0x10] sm:$0xff]
        %v315 = vld [vmem:[%s1 + $0x18] sm:$0xff]
        %v316 = vld [vmem:[%s2] sm:$0x3]
        %v318 = vlaneseq
        %v319 = vshrl.u32 %v318, 7
        %v320 = vsub.s32 0, %v319
        %v321 = vrot.slane %v316, %v320
        %v322 = vlaneseq
        %v323 = vshrl.u32 %v322, 7
        %v324 = vsub.s32 1, %v323
        %v325 = vrot.slane %v316, %v324
        %v344 = vunpack.c.l.b16 %v296
        %v345 = vunpack.c.l.b16 %v297
        %v346 = vunpack.c.l.b16 %v298
        %v347 = vunpack.c.l.b16 %v299
        %v348 = vunpack.c.l.b16 %v300
        %v349 = vunpack.c.l.b16 %v301
        %v350 = vunpack.c.l.b16 %v302
        %v351 = vunpack.c.l.b16 %v303
        %v352 = vunpack.c.l.b16 %v304
        %v353 = vunpack.c.l.b16 %v305
        %v354 = vunpack.c.l.b16 %v306
        %v355 = vunpack.c.l.b16 %v307
        %v356 = vunpack.c.l.b16 %v308
        %v357 = vunpack.c.l.b16 %v309
        %v358 = vunpack.c.l.b16 %v310
        %v359 = vunpack.c.l.b16 %v311
        %v360 = vpack.c.b16 %v345, %v344
        %v361 = vpack.c.b16 %v347, %v346
        %v362 = vpack.c.b16 %v349, %v348
        %v363 = vpack.c.b16 %v351, %v350
        %v364 = vpack.c.b16 %v353, %v352
        %v365 = vpack.c.b16 %v355, %v354
        %v366 = vpack.c.b16 %v357, %v356
        %v367 = vpack.c.b16 %v359, %v358
        %v372 = vunpack.c.l.b16 %v312
        %v373 = vunpack.c.h.b16 %v312
        %v374 = vunpack.c.l.b16 %v313
        %v375 = vunpack.c.h.b16 %v313
        %v376 = vunpack.c.l.b16 %v314
        %v377 = vunpack.c.h.b16 %v314
        %v378 = vunpack.c.l.b16 %v315
        %v379 = vunpack.c.h.b16 %v315
        %v380 = vpack.c.b16 %v374, %v372
        %v381 = vpack.c.b16 %v375, %v373
        %v382 = vpack.c.b16 %v378, %v376
        %v383 = vpack.c.b16 %v379, %v377
        %vm388 = vcmask 261120
        %v390 = vsel %vm388, %v360, 0
        %v393 = vsel %vm388, %v361, 0
        %v396 = vsel %vm388, %v362, 0
        %v399 = vsel %vm388, %v363, 0
        %v402 = vsel %vm388, %v364, 0
        %v405 = vsel %vm388, %v365, 0
        %v408 = vsel %vm388, %v366, 0
        %v411 = vsel %vm388, %v367, 0
        %413 = vmatprep.subr.bf16.mxu0 %v381
        %414 = vmatpush1.bf16.msra.mxu0 %v380
        %415 = vmatprep.subr.bf16.mxu0 %v383
        %416 = vmatpush1.bf16.msra.mxu0 %v382
        %417 = vmatprep.subr.bf16.mxu0 0
        %418 = vmatpush1.bf16.msra.mxu0 0
        %419 = vmatprep.subr.bf16.mxu0 0
        %420 = vmatpush1.bf16.msra.mxu0 0
        %421 = vmatprep.subr.bf16.mxu0 0
        %422 = vmatpush1.bf16.msra.mxu0 0
        %423 = vmatprep.subr.bf16.mxu0 0
        %424 = vmatpush1.bf16.msra.mxu0 0
        %425 = vmatprep.subr.bf16.mxu0 0
        %426 = vmatpush1.bf16.msra.mxu0 0
        %427 = vmatprep.subr.bf16.mxu0 0
        %428 = vmatpush1.bf16.msra.mxu0 0
        %429 = vmatprep.subr.bf16.mxu0 0
        %430 = vmatpush1.bf16.msra.mxu0 0
        %431 = vmatprep.subr.bf16.mxu0 0
        %432 = vmatpush1.bf16.msra.mxu0 0
        %433 = vmatprep.subr.bf16.mxu0 0
        %434 = vmatpush1.bf16.msra.mxu0 0
        %435 = vmatprep.subr.bf16.mxu0 0
        %436 = vmatpush1.bf16.msra.mxu0 0
        %437 = vmatprep.subr.bf16.mxu0 0
        %438 = vmatpush1.bf16.msra.mxu0 0
        %439 = vmatprep.subr.bf16.mxu0 0
        %440 = vmatpush1.bf16.msra.mxu0 0
        %441 = vmatprep.subr.bf16.mxu0 0
        %442 = vmatpush1.bf16.msra.mxu0 0
        %443 = vmatprep.subr.bf16.mxu0 0
        %444 = vmatpush1.bf16.msra.mxu0 0
        %445 = vmatprep.mubr.bf16.mxu0 0
        %446 = vmatmul.mubr.bf16.gmra.mrb[0].mxu0 %v390
        %v447 = vpop.f32.mrb[0].mxu0
        %v448 = vadd.f32 %v321, %v447
        %v449 = vpop.f32.mrb[0].mxu0
        %v450 = vadd.f32 %v325, %v449
        %v451 = vpop.f32.mrb[0].mxu0
        %v452 = vadd.f32 %v321, %v451
        %v453 = vpop.f32.mrb[0].mxu0
        %v454 = vadd.f32 %v325, %v453
        %455 = vmatprep.mubr.bf16.mxu0 0
        %456 = vmatmul.mubr.bf16.gmra.mrb[0].mxu0 %v393
        %v457 = vpop.f32.mrb[0].mxu0
        %v458 = vadd.f32 %v321, %v457
        %v459 = vpop.f32.mrb[0].mxu0
        %v460 = vadd.f32 %v325, %v459
        %v461 = vpop.f32.mrb[0].mxu0
        %v462 = vadd.f32 %v321, %v461
        %v463 = vpop.f32.mrb[0].mxu0
        %v464 = vadd.f32 %v325, %v463
        %465 = vmatprep.mubr.bf16.mxu0 0
        %466 = vmatmul.mubr.bf16.gmra.mrb[0].mxu0 %v396
        %v467 = vpop.f32.mrb[0].mxu0
        %v468 = vadd.f32 %v321, %v467
        %v469 = vpop.f32.mrb[0].mxu0
        %v470 = vadd.f32 %v325, %v469
        %v471 = vpop.f32.mrb[0].mxu0
        %v472 = vadd.f32 %v321, %v471
        %v473 = vpop.f32.mrb[0].mxu0
        %v474 = vadd.f32 %v325, %v473
        %475 = vmatprep.mubr.bf16.mxu0 0
        %476 = vmatmul.mubr.bf16.gmra.mrb[0].mxu0 %v399
        %v477 = vpop.f32.mrb[0].mxu0
        %v478 = vadd.f32 %v321, %v477
        %v479 = vpop.f32.mrb[0].mxu0
        %v480 = vadd.f32 %v325, %v479
        %v481 = vpop.f32.mrb[0].mxu0
        %v482 = vadd.f32 %v321, %v481
        %v483 = vpop.f32.mrb[0].mxu0
        %v484 = vadd.f32 %v325, %v483
        %485 = vmatprep.mubr.bf16.mxu0 0
        %486 = vmatmul.mubr.bf16.gmra.mrb[0].mxu0 %v402
        %v487 = vpop.f32.mrb[0].mxu0
        %v488 = vadd.f32 %v321, %v487
        %v489 = vpop.f32.mrb[0].mxu0
        %v490 = vadd.f32 %v325, %v489
        %v491 = vpop.f32.mrb[0].mxu0
        %v492 = vadd.f32 %v321, %v491
        %v493 = vpop.f32.mrb[0].mxu0
        %v494 = vadd.f32 %v325, %v493
        %495 = vmatprep.mubr.bf16.mxu0 0
        %496 = vmatmul.mubr.bf16.gmra.mrb[0].mxu0 %v405
        %v497 = vpop.f32.mrb[0].mxu0
        %v498 = vadd.f32 %v321, %v497
        %v499 = vpop.f32.mrb[0].mxu0
        %v500 = vadd.f32 %v325, %v499
        %v501 = vpop.f32.mrb[0].mxu0
        %v502 = vadd.f32 %v321, %v501
        %v503 = vpop.f32.mrb[0].mxu0
        %v504 = vadd.f32 %v325, %v503
        %505 = vmatprep.mubr.bf16.mxu0 0
        %506 = vmatmul.mubr.bf16.gmra.mrb[0].mxu0 %v408
        %v507 = vpop.f32.mrb[0].mxu0
        %v508 = vadd.f32 %v321, %v507
        %v509 = vpop.f32.mrb[0].mxu0
        %v510 = vadd.f32 %v325, %v509
        %v511 = vpop.f32.mrb[0].mxu0
        %v512 = vadd.f32 %v321, %v511
        %v513 = vpop.f32.mrb[0].mxu0
        %v514 = vadd.f32 %v325, %v513
        %515 = vmatprep.mubr.bf16.mxu0 0
        %516 = vmatmul.mubr.bf16.gmra.mrb[0].mxu0 %v411
        %v517 = vpop.f32.mrb[0].mxu0
        %v518 = vadd.f32 %v321, %v517
        %v519 = vpop.f32.mrb[0].mxu0
        %v520 = vadd.f32 %v325, %v519
        %v521 = vpop.f32.mrb[0].mxu0
        %v522 = vadd.f32 %v321, %v521
        %v523 = vpop.f32.mrb[0].mxu0
        %v524 = vadd.f32 %v325, %v523
        %525 = vdwg.mxu0
        %v526 = vmax.f32 %v448, 0.0
        %v527 = vmax.f32 %v450, 0.0
        %v528 = vmax.f32 %v452, 0.0
        %v529 = vmax.f32 %v454, 0.0
        %v530 = vmax.f32 %v458, 0.0
        %v531 = vmax.f32 %v460, 0.0
        %v532 = vmax.f32 %v462, 0.0
        %v533 = vmax.f32 %v464, 0.0
        %v534 = vmax.f32 %v468, 0.0
        %v535 = vmax.f32 %v470, 0.0
        %v536 = vmax.f32 %v472, 0.0
        %v537 = vmax.f32 %v474, 0.0
        %v538 = vmax.f32 %v478, 0.0
        %v539 = vmax.f32 %v480, 0.0
        %v540 = vmax.f32 %v482, 0.0
        %v541 = vmax.f32 %v484, 0.0
        %v542 = vmax.f32 %v488, 0.0
        %v543 = vmax.f32 %v490, 0.0
        %v544 = vmax.f32 %v492, 0.0
        %v545 = vmax.f32 %v494, 0.0
        %v546 = vmax.f32 %v498, 0.0
        %v547 = vmax.f32 %v500, 0.0
        %v548 = vmax.f32 %v502, 0.0
        %v549 = vmax.f32 %v504, 0.0
        %v550 = vmax.f32 %v508, 0.0
        %v551 = vmax.f32 %v510, 0.0
        %v552 = vmax.f32 %v512, 0.0
        %v553 = vmax.f32 %v514, 0.0
        %v554 = vmax.f32 %v518, 0.0
        %v555 = vmax.f32 %v520, 0.0
        %v556 = vmax.f32 %v522, 0.0
        %v557 = vmax.f32 %v524, 0.0
        %v558 = vpack.c.bf16 %v528, %v526
        %v559 = vpack.c.bf16 %v529, %v527
        %v560 = vpack.c.bf16 %v532, %v530
        %v561 = vpack.c.bf16 %v533, %v531
        %v562 = vpack.c.bf16 %v536, %v534
        %v563 = vpack.c.bf16 %v537, %v535
        %v564 = vpack.c.bf16 %v540, %v538
        %v565 = vpack.c.bf16 %v541, %v539
        %v566 = vpack.c.bf16 %v544, %v542
        %v567 = vpack.c.bf16 %v545, %v543
        %v568 = vpack.c.bf16 %v548, %v546
        %v569 = vpack.c.bf16 %v549, %v547
        %v570 = vpack.c.bf16 %v552, %v550
        %v571 = vpack.c.bf16 %v553, %v551
        %v572 = vpack.c.bf16 %v556, %v554
        %v573 = vpack.c.bf16 %v557, %v555
        %v574 = vld [vmem:[#allocation3] sm:$0xff]
        %v575 = vld [vmem:[#allocation3 + $0x8] sm:$0xff]
        %v576 = vld [vmem:[#allocation3 + $0x10] sm:$0xff]
        %v577 = vld [vmem:[#allocation3 + $0x18] sm:$0xff]
        %v578 = vld [vmem:[#allocation3 + $0x20] sm:$0xff]
        %v579 = vld [vmem:[#allocation3 + $0x28] sm:$0xff]
        %v580 = vld [vmem:[#allocation3 + $0x30] sm:$0xff]
        %v581 = vld [vmem:[#allocation3 + $0x38] sm:$0xff]
        %v582 = vld [vmem:[#allocation3 + $0x40] sm:$0xff]
        %v583 = vld [vmem:[#allocation3 + $0x48] sm:$0xff]
        %v584 = vld [vmem:[#allocation3 + $0x50] sm:$0xff]
        %v585 = vld [vmem:[#allocation3 + $0x58] sm:$0xff]
        %v586 = vld [vmem:[#allocation3 + $0x60] sm:$0xff]
        %v587 = vld [vmem:[#allocation3 + $0x68] sm:$0xff]
        %v588 = vld [vmem:[#allocation3 + $0x70] sm:$0xff]
        %v589 = vld [vmem:[#allocation3 + $0x78] sm:$0xff]
        %v590 = vld [vmem:[#allocation3 + $0x80] sm:$0xff]
        %v591 = vld [vmem:[#allocation3 + $0x88] sm:$0xff]
        %v592 = vld [vmem:[#allocation3 + $0x90] sm:$0xff]
        %v593 = vld [vmem:[#allocation3 + $0x98] sm:$0xff]
        %v594 = vld [vmem:[#allocation3 + $0xa0] sm:$0xff]
        %v595 = vld [vmem:[#allocation3 + $0xa8] sm:$0xff]
        %v596 = vld [vmem:[#allocation3 + $0xb0] sm:$0xff]
        %v597 = vld [vmem:[#allocation3 + $0xb8] sm:$0xff]
        %v598 = vld [vmem:[#allocation3 + $0xc0] sm:$0xff]
        %v599 = vld [vmem:[#allocation3 + $0xc8] sm:$0xff]
        %v600 = vld [vmem:[#allocation3 + $0xd0] sm:$0xff]
        %v601 = vld [vmem:[#allocation3 + $0xd8] sm:$0xff]
        %v602 = vld [vmem:[#allocation3 + $0xe0] sm:$0xff]
        %v603 = vld [vmem:[#allocation3 + $0xe8] sm:$0xff]
        %v604 = vld [vmem:[#allocation3 + $0xf0] sm:$0xff]
        %v605 = vld [vmem:[#allocation3 + $0xf8] sm:$0xff]
        %v606 = vld [vmem:[%s4] sm:$0x3]
        %v608 = vlaneseq
        %v609 = vshrl.u32 %v608, 7
        %v610 = vsub.s32 0, %v609
        %v611 = vrot.slane %v606, %v610
        %v612 = vlaneseq
        %v613 = vshrl.u32 %v612, 7
        %v614 = vsub.s32 1, %v613
        %v615 = vrot.slane %v606, %v614
        %v650 = vunpack.c.l.b16 %v574
        %v651 = vunpack.c.h.b16 %v574
        %v652 = vunpack.c.l.b16 %v575
        %v653 = vunpack.c.h.b16 %v575
        %v654 = vunpack.c.l.b16 %v576
        %v655 = vunpack.c.h.b16 %v576
        %v656 = vunpack.c.l.b16 %v577
        %v657 = vunpack.c.h.b16 %v577
        %v658 = vunpack.c.l.b16 %v578
        %v659 = vunpack.c.h.b16 %v578
        %v660 = vunpack.c.l.b16 %v579
        %v661 = vunpack.c.h.b16 %v579
        %v662 = vunpack.c.l.b16 %v580
        %v663 = vunpack.c.h.b16 %v580
        %v664 = vunpack.c.l.b16 %v581
        %v665 = vunpack.c.h.b16 %v581
        %v666 = vunpack.c.l.b16 %v582
        %v667 = vunpack.c.h.b16 %v582
        %v668 = vunpack.c.l.b16 %v583
        %v669 = vunpack.c.h.b16 %v583
        %v670 = vunpack.c.l.b16 %v584
        %v671 = vunpack.c.h.b16 %v584
        %v672 = vunpack.c.l.b16 %v585
        %v673 = vunpack.c.h.b16 %v585
        %v674 = vunpack.c.l.b16 %v586
        %v675 = vunpack.c.h.b16 %v586
        %v676 = vunpack.c.l.b16 %v587
        %v677 = vunpack.c.h.b16 %v587
        %v678 = vunpack.c.l.b16 %v588
        %v679 = vunpack.c.h.b16 %v588
        %v680 = vunpack.c.l.b16 %v589
        %v681 = vunpack.c.h.b16 %v589
        %v682 = vunpack.c.l.b16 %v590
        %v683 = vunpack.c.h.b16 %v590
        %v684 = vunpack.c.l.b16 %v591
        %v685 = vunpack.c.h.b16 %v591
        %v686 = vunpack.c.l.b16 %v592
        %v687 = vunpack.c.h.b16 %v592
        %v688 = vunpack.c.l.b16 %v593
        %v689 = vunpack.c.h.b16 %v593
        %v690 = vunpack.c.l.b16 %v594
        %v691 = vunpack.c.h.b16 %v594
        %v692 = vunpack.c.l.b16 %v595
        %v693 = vunpack.c.h.b16 %v595
        %v694 = vunpack.c.l.b16 %v596
        %v695 = vunpack.c.h.b16 %v596
        %v696 = vunpack.c.l.b16 %v597
        %v697 = vunpack.c.h.b16 %v597
        %v698 = vunpack.c.l.b16 %v598
        %v699 = vunpack.c.h.b16 %v598
        %v700 = vunpack.c.l.b16 %v599
        %v701 = vunpack.c.h.b16 %v599
        %v702 = vunpack.c.l.b16 %v600
        %v703 = vunpack.c.h.b16 %v600
        %v704 = vunpack.c.l.b16 %v601
        %v705 = vunpack.c.h.b16 %v601
        %v706 = vunpack.c.l.b16 %v602
        %v707 = vunpack.c.h.b16 %v602
        %v708 = vunpack.c.l.b16 %v603
        %v709 = vunpack.c.h.b16 %v603
        %v710 = vunpack.c.l.b16 %v604
        %v711 = vunpack.c.h.b16 %v604
        %v712 = vunpack.c.l.b16 %v605
        %v713 = vunpack.c.h.b16 %v605
        %v714 = vpack.c.b16 %v652, %v650
        %v715 = vpack.c.b16 %v653, %v651
        %v716 = vpack.c.b16 %v656, %v654
        %v717 = vpack.c.b16 %v657, %v655
        %v718 = vpack.c.b16 %v660, %v658
        %v719 = vpack.c.b16 %v661, %v659
        %v720 = vpack.c.b16 %v664, %v662
        %v721 = vpack.c.b16 %v665, %v663
        %v722 = vpack.c.b16 %v668, %v666
        %v723 = vpack.c.b16 %v669, %v667
        %v724 = vpack.c.b16 %v672, %v670
        %v725 = vpack.c.b16 %v673, %v671
        %v726 = vpack.c.b16 %v676, %v674
        %v727 = vpack.c.b16 %v677, %v675
        %v728 = vpack.c.b16 %v680, %v678
        %v729 = vpack.c.b16 %v681, %v679
        %v730 = vpack.c.b16 %v684, %v682
        %v731 = vpack.c.b16 %v685, %v683
        %v732 = vpack.c.b16 %v688, %v686
        %v733 = vpack.c.b16 %v689, %v687
        %v734 = vpack.c.b16 %v692, %v690
        %v735 = vpack.c.b16 %v693, %v691
        %v736 = vpack.c.b16 %v696, %v694
        %v737 = vpack.c.b16 %v697, %v695
        %v738 = vpack.c.b16 %v700, %v698
        %v739 = vpack.c.b16 %v701, %v699
        %v740 = vpack.c.b16 %v704, %v702
        %v741 = vpack.c.b16 %v705, %v703
        %v742 = vpack.c.b16 %v708, %v706
        %v743 = vpack.c.b16 %v709, %v707
        %v744 = vpack.c.b16 %v712, %v710
        %v745 = vpack.c.b16 %v713, %v711
        %778 = vmatprep.subr.bf16.mxu0 %v715
        %779 = vmatpush1.bf16.msra.mxu0 %v714
        %780 = vmatprep.subr.bf16.mxu0 %v717
        %781 = vmatpush1.bf16.msra.mxu0 %v716
        %782 = vmatprep.subr.bf16.mxu0 %v719
        %783 = vmatpush1.bf16.msra.mxu0 %v718
        %784 = vmatprep.subr.bf16.mxu0 %v721
        %785 = vmatpush1.bf16.msra.mxu0 %v720
        %786 = vmatprep.subr.bf16.mxu0 %v723
        %787 = vmatpush1.bf16.msra.mxu0 %v722
        %788 = vmatprep.subr.bf16.mxu0 %v725
        %789 = vmatpush1.bf16.msra.mxu0 %v724
        %790 = vmatprep.subr.bf16.mxu0 %v727
        %791 = vmatpush1.bf16.msra.mxu0 %v726
        %792 = vmatprep.subr.bf16.mxu0 %v729
        %793 = vmatpush1.bf16.msra.mxu0 %v728
        %794 = vmatprep.subr.bf16.mxu0 %v731
        %795 = vmatpush1.bf16.msra.mxu0 %v730
        %796 = vmatprep.subr.bf16.mxu0 %v733
        %797 = vmatpush1.bf16.msra.mxu0 %v732
        %798 = vmatprep.subr.bf16.mxu0 %v735
        %799 = vmatpush1.bf16.msra.mxu0 %v734
        %800 = vmatprep.subr.bf16.mxu0 %v737
        %801 = vmatpush1.bf16.msra.mxu0 %v736
        %802 = vmatprep.subr.bf16.mxu0 %v739
        %803 = vmatpush1.bf16.msra.mxu0 %v738
        %804 = vmatprep.subr.bf16.mxu0 %v741
        %805 = vmatpush1.bf16.msra.mxu0 %v740
        %806 = vmatprep.subr.bf16.mxu0 %v743
        %807 = vmatpush1.bf16.msra.mxu0 %v742
        %808 = vmatprep.subr.bf16.mxu0 %v745
        %809 = vmatpush1.bf16.msra.mxu0 %v744
        %810 = vmatprep.mubr.bf16.mxu0 %v559
        %811 = vmatmul.mubr.bf16.gmra.mrb[0].mxu0 %v558
        %v812 = vpop.f32.mrb[0].mxu0
        %v813 = vadd.f32 %v611, %v812
        %v814 = vpop.f32.mrb[0].mxu0
        %v815 = vadd.f32 %v615, %v814
        %v816 = vpop.f32.mrb[0].mxu0
        %v817 = vadd.f32 %v611, %v816
        %v818 = vpop.f32.mrb[0].mxu0
        %v819 = vadd.f32 %v615, %v818
        %820 = vmatprep.mubr.bf16.mxu0 %v561
        %821 = vmatmul.mubr.bf16.gmra.mrb[0].mxu0 %v560
        %v822 = vpop.f32.mrb[0].mxu0
        %v823 = vadd.f32 %v611, %v822
        %v824 = vpop.f32.mrb[0].mxu0
        %v825 = vadd.f32 %v615, %v824
        %v826 = vpop.f32.mrb[0].mxu0
        %v827 = vadd.f32 %v611, %v826
        %v828 = vpop.f32.mrb[0].mxu0
        %v829 = vadd.f32 %v615, %v828
        %830 = vmatprep.mubr.bf16.mxu0 %v563
        %831 = vmatmul.mubr.bf16.gmra.mrb[0].mxu0 %v562
        %v832 = vpop.f32.mrb[0].mxu0
        %v833 = vadd.f32 %v611, %v832
        %v834 = vpop.f32.mrb[0].mxu0
        %v835 = vadd.f32 %v615, %v834
        %v836 = vpop.f32.mrb[0].mxu0
        %v837 = vadd.f32 %v611, %v836
        %v838 = vpop.f32.mrb[0].mxu0
        %v839 = vadd.f32 %v615, %v838
        %840 = vmatprep.mubr.bf16.mxu0 %v565
        %841 = vmatmul.mubr.bf16.gmra.mrb[0].mxu0 %v564
        %v842 = vpop.f32.mrb[0].mxu0
        %v843 = vadd.f32 %v611, %v842
        %v844 = vpop.f32.mrb[0].mxu0
        %v845 = vadd.f32 %v615, %v844
        %v846 = vpop.f32.mrb[0].mxu0
        %v847 = vadd.f32 %v611, %v846
        %v848 = vpop.f32.mrb[0].mxu0
        %v849 = vadd.f32 %v615, %v848
        %850 = vmatprep.mubr.bf16.mxu0 %v567
        %851 = vmatmul.mubr.bf16.gmra.mrb[0].mxu0 %v566
        %v852 = vpop.f32.mrb[0].mxu0
        %v853 = vadd.f32 %v611, %v852
        %v854 = vpop.f32.mrb[0].mxu0
        %v855 = vadd.f32 %v615, %v854
        %v856 = vpop.f32.mrb[0].mxu0
        %v857 = vadd.f32 %v611, %v856
        %v858 = vpop.f32.mrb[0].mxu0
        %v859 = vadd.f32 %v615, %v858
        %860 = vmatprep.mubr.bf16.mxu0 %v569
        %861 = vmatmul.mubr.bf16.gmra.mrb[0].mxu0 %v568
        %v862 = vpop.f32.mrb[0].mxu0
        %v863 = vadd.f32 %v611, %v862
        %v864 = vpop.f32.mrb[0].mxu0
        %v865 = vadd.f32 %v615, %v864
        %v866 = vpop.f32.mrb[0].mxu0
        %v867 = vadd.f32 %v611, %v866
        %v868 = vpop.f32.mrb[0].mxu0
        %v869 = vadd.f32 %v615, %v868
        %870 = vmatprep.mubr.bf16.mxu0 %v571
        %871 = vmatmul.mubr.bf16.gmra.mrb[0].mxu0 %v570
        %v872 = vpop.f32.mrb[0].mxu0
        %v873 = vadd.f32 %v611, %v872
        %v874 = vpop.f32.mrb[0].mxu0
        %v875 = vadd.f32 %v615, %v874
        %v876 = vpop.f32.mrb[0].mxu0
        %v877 = vadd.f32 %v611, %v876
        %v878 = vpop.f32.mrb[0].mxu0
        %v879 = vadd.f32 %v615, %v878
        %880 = vmatprep.mubr.bf16.mxu0 %v573
        %881 = vmatmul.mubr.bf16.gmra.mrb[0].mxu0 %v572
        %v882 = vpop.f32.mrb[0].mxu0
        %v883 = vadd.f32 %v611, %v882
        %v884 = vpop.f32.mrb[0].mxu0
        %v885 = vadd.f32 %v615, %v884
        %v886 = vpop.f32.mrb[0].mxu0
        %v887 = vadd.f32 %v611, %v886
        %v888 = vpop.f32.mrb[0].mxu0
        %v889 = vadd.f32 %v615, %v888
        %890 = vdwg.mxu0
        %v891 = vmax.f32 %v813, 0.0
        %v892 = vmax.f32 %v815, 0.0
        %v893 = vmax.f32 %v817, 0.0
        %v894 = vmax.f32 %v819, 0.0
        %v895 = vmax.f32 %v823, 0.0
        %v896 = vmax.f32 %v825, 0.0
        %v897 = vmax.f32 %v827, 0.0
        %v898 = vmax.f32 %v829, 0.0
        %v899 = vmax.f32 %v833, 0.0
        %v900 = vmax.f32 %v835, 0.0
        %v901 = vmax.f32 %v837, 0.0
        %v902 = vmax.f32 %v839, 0.0
        %v903 = vmax.f32 %v843, 0.0
        %v904 = vmax.f32 %v845, 0.0
        %v905 = vmax.f32 %v847, 0.0
        %v906 = vmax.f32 %v849, 0.0
        %v907 = vmax.f32 %v853, 0.0
        %v908 = vmax.f32 %v855, 0.0
        %v909 = vmax.f32 %v857, 0.0
        %v910 = vmax.f32 %v859, 0.0
        %v911 = vmax.f32 %v863, 0.0
        %v912 = vmax.f32 %v865, 0.0
        %v913 = vmax.f32 %v867, 0.0
        %v914 = vmax.f32 %v869, 0.0
        %v915 = vmax.f32 %v873, 0.0
        %v916 = vmax.f32 %v875, 0.0
        %v917 = vmax.f32 %v877, 0.0
        %v918 = vmax.f32 %v879, 0.0
        %v919 = vmax.f32 %v883, 0.0
        %v920 = vmax.f32 %v885, 0.0
        %v921 = vmax.f32 %v887, 0.0
        %v922 = vmax.f32 %v889, 0.0
        %v923 = vld [vmem:[%s5] sm:$0x3]
        %v925 = vlaneseq
        %v926 = vshrl.u32 %v925, 7
        %v927 = vsub.s32 0, %v926
        %v928 = vrot.slane %v923, %v927
        %v929 = vlaneseq
        %v930 = vshrl.u32 %v929, 7
        %v931 = vsub.s32 1, %v930
        %v932 = vrot.slane %v923, %v931
        %v935 = vmul.f32 %v891, %v928
        %v936 = vmul.f32 %v892, %v932
        %v937 = vmul.f32 %v893, %v928
        %v938 = vmul.f32 %v894, %v932
        %v939 = vmul.f32 %v895, %v928
        %v940 = vmul.f32 %v896, %v932
        %v941 = vmul.f32 %v897, %v928
        %v942 = vmul.f32 %v898, %v932
        %v943 = vmul.f32 %v899, %v928
        %v944 = vmul.f32 %v900, %v932
        %v945 = vmul.f32 %v901, %v928
        %v946 = vmul.f32 %v902, %v932
        %v947 = vmul.f32 %v903, %v928
        %v948 = vmul.f32 %v904, %v932
        %v949 = vmul.f32 %v905, %v928
        %v950 = vmul.f32 %v906, %v932
        %v951 = vmul.f32 %v907, %v928
        %v952 = vmul.f32 %v908, %v932
        %v953 = vmul.f32 %v909, %v928
        %v954 = vmul.f32 %v910, %v932
        %v955 = vmul.f32 %v911, %v928
        %v956 = vmul.f32 %v912, %v932
        %v957 = vmul.f32 %v913, %v928
        %v958 = vmul.f32 %v914, %v932
        %v959 = vmul.f32 %v915, %v928
        %v960 = vmul.f32 %v916, %v932
        %v961 = vmul.f32 %v917, %v928
        %v962 = vmul.f32 %v918, %v932
        %v963 = vmul.f32 %v919, %v928
        %v964 = vmul.f32 %v920, %v932
        %v965 = vmul.f32 %v921, %v928
        %v966 = vmul.f32 %v922, %v932
        %v967 = vadd.f32 %v935, %v936
        %968 = vadd.xlane.f32.xlu0 %v967
        %v969 = vpop.xlane.xlu0 %968
        %v970 = vadd.f32 %v937, %v938
        %971 = vadd.xlane.f32.xlu0 %v970
        %v972 = vpop.xlane.xlu0 %971
        %v973 = vadd.f32 %v939, %v940
        %974 = vadd.xlane.f32.xlu0 %v973
        %v975 = vpop.xlane.xlu0 %974
        %v976 = vadd.f32 %v941, %v942
        %977 = vadd.xlane.f32.xlu0 %v976
        %v978 = vpop.xlane.xlu0 %977
        %v979 = vadd.f32 %v943, %v944
        %980 = vadd.xlane.f32.xlu0 %v979
        %v981 = vpop.xlane.xlu0 %980
        %v982 = vadd.f32 %v945, %v946
        %983 = vadd.xlane.f32.xlu0 %v982
        %v984 = vpop.xlane.xlu0 %983
        %v985 = vadd.f32 %v947, %v948
        %986 = vadd.xlane.f32.xlu0 %v985
        %v987 = vpop.xlane.xlu0 %986
        %v988 = vadd.f32 %v949, %v950
        %989 = vadd.xlane.f32.xlu0 %v988
        %v990 = vpop.xlane.xlu0 %989
        %v991 = vadd.f32 %v951, %v952
        %992 = vadd.xlane.f32.xlu0 %v991
        %v993 = vpop.xlane.xlu0 %992
        %v994 = vadd.f32 %v953, %v954
        %995 = vadd.xlane.f32.xlu0 %v994
        %v996 = vpop.xlane.xlu0 %995
        %v997 = vadd.f32 %v955, %v956
        %998 = vadd.xlane.f32.xlu0 %v997
        %v999 = vpop.xlane.xlu0 %998
        %v1000 = vadd.f32 %v957, %v958
        %1001 = vadd.xlane.f32.xlu0 %v1000
        %v1002 = vpop.xlane.xlu0 %1001
        %v1003 = vadd.f32 %v959, %v960
        %1004 = vadd.xlane.f32.xlu0 %v1003
        %v1005 = vpop.xlane.xlu0 %1004
        %v1006 = vadd.f32 %v961, %v962
        %1007 = vadd.xlane.f32.xlu0 %v1006
        %v1008 = vpop.xlane.xlu0 %1007
        %v1009 = vadd.f32 %v963, %v964
        %1010 = vadd.xlane.f32.xlu0 %v1009
        %v1011 = vpop.xlane.xlu0 %1010
        %v1012 = vadd.f32 %v965, %v966
        %1013 = vadd.xlane.f32.xlu0 %v1012
        %v1014 = vpop.xlane.xlu0 %1013
        %v1015 = vld [vmem:[#allocation2] sm:$0x1]
        %v1017 = vlaneseq
        %v1018 = vshrl.u32 %v1017, 7
        %v1019 = vsub.s32 0, %v1018
        %v1020 = vrot.slane %v1015, %v1019
        %v1022 = vadd.f32 %v969, %v1020
        %v1023 = vadd.f32 %v972, %v1020
        %v1024 = vadd.f32 %v975, %v1020
        %v1025 = vadd.f32 %v978, %v1020
        %v1026 = vadd.f32 %v981, %v1020
        %v1027 = vadd.f32 %v984, %v1020
        %v1028 = vadd.f32 %v987, %v1020
        %v1029 = vadd.f32 %v990, %v1020
        %v1030 = vadd.f32 %v993, %v1020
        %v1031 = vadd.f32 %v996, %v1020
        %v1032 = vadd.f32 %v999, %v1020
        %v1033 = vadd.f32 %v1002, %v1020
        %v1034 = vadd.f32 %v1005, %v1020
        %v1035 = vadd.f32 %v1008, %v1020
        %v1036 = vadd.f32 %v1011, %v1020
        %v1037 = vadd.f32 %v1014, %v1020
        %1038 = vxpose.xlu0.b32.start [1/16] %v1022, 128
        %1039 = vxpose.xlu0.b32.cont [2/16] %v1023, 128
        %1040 = vxpose.xlu0.b32.cont [3/16] %v1024, 128
        %1041 = vxpose.xlu0.b32.cont [4/16] %v1025, 128
        %1042 = vxpose.xlu0.b32.cont [5/16] %v1026, 128
        %1043 = vxpose.xlu0.b32.cont [6/16] %v1027, 128
        %1044 = vxpose.xlu0.b32.cont [7/16] %v1028, 128
        %1045 = vxpose.xlu0.b32.cont [8/16] %v1029, 128
        %1046 = vxpose.xlu0.b32.cont [9/16] %v1030, 128
        %1047 = vxpose.xlu0.b32.cont [10/16] %v1031, 128
        %1048 = vxpose.xlu0.b32.cont [11/16] %v1032, 128
        %1049 = vxpose.xlu0.b32.cont [12/16] %v1033, 128
        %1050 = vxpose.xlu0.b32.cont [13/16] %v1034, 128
        %1051 = vxpose.xlu0.b32.cont [14/16] %v1035, 128
        %1052 = vxpose.xlu0.b32.cont [15/16] %v1036, 128
        %1053 = vxpose.xlu0.b32.end [16/16] %v1037, 128
        %v1054 = vpop.trf.xlu0
        %v1055 = vpop.trf.xlu0
        %v1056 = vpop.trf.xlu0
        %v1057 = vpop.trf.xlu0
        %v1058 = vpop.trf.xlu0
        %v1059 = vpop.trf.xlu0
        %v1060 = vpop.trf.xlu0
        %v1061 = vpop.trf.xlu0
        %v1062 = vpop.trf.xlu0
        %v1063 = vpop.trf.xlu0
        %v1064 = vpop.trf.xlu0
        %v1065 = vpop.trf.xlu0
        %v1066 = vpop.trf.xlu0
        %v1067 = vpop.trf.xlu0
        %v1068 = vpop.trf.xlu0
        %v1069 = vpop.trf.xlu0
        %1070 = vst [vmem:[%s288] sm:$0x1] %v1054
        %s1071 = sand.u32 %s184, 1
        %s1072 = scalar_lea.sflag [#allocation5], %s1071
        %s1073 = sand.u32 %s184, 1
        %s1074 = scalar_lea.vmem [#allocation6], %s1073
        // Predicated region
        $region53: #{tpu_custom_call.1} parent=47 // pred_check
          %p1075 = pneg %p194
        $region54: #{tpu_custom_call.1} parent=47 // pred_check_branch
          %1077 = sbr.rel (%p1075) target = $region56
        $region55: #{tpu_custom_call.1} parent=47 // pred_region
          %s1079 = ssub.s32 16, 16
          %1080 = vsyncadd %s1072, %s1079
          %s1081 = smul.addr %s24, 16
          %s1082 = scalar_lea.hbm %s7, %s1081
          %s1084 = sshll.u32 %s1074, 4
          %s1085 = int_to_ptr.vmem [resolvable:$true] %s1084
          %1087 = dma.vmem_to_hbm [thread:$0]  %s1085, 16, %s1082, %s1072
        $region56: #{tpu_custom_call.1} parent=47 // pred_fallthru
          _
      $region48: #{tpu_custom_call.1} parent=5 // pred_fallthru
        _
      %p1088 = scmp.le.s32.totalorder 2, %s19
      // Predicated region
      $region57: #{tpu_custom_call.1} parent=5 // pred_check
        %p1089 = pneg %p1088
      $region58: #{tpu_custom_call.1} parent=5 // pred_check_branch
        %1091 = sbr.rel (%p1089) target = $region60
      $region59: #{tpu_custom_call.1} parent=5 // pred_region
        %s1092 = ssub.s32 %s19, 2
        // Predicated region
        $region61: #{tpu_custom_call.1} parent=59 // pred_check
          %p1093 = pneg %p200
        $region62: #{tpu_custom_call.1} parent=59 // pred_check_branch
          %1095 = sbr.rel (%p1093) target = $region64
        $region63: #{tpu_custom_call.1} parent=59 // pred_region
          %s1096 = sand.u32 %s185, 1
          %s1097 = scalar_lea.sflag [#allocation5], %s1096
          %s1098 = sand.u32 %s185, 1
          %s1099 = scalar_lea.vmem [#allocation6], %s1098
          %1100 = dma.done %s1097, 16
        $region64: #{tpu_custom_call.1} parent=59 // pred_fallthru
          _
      $region60: #{tpu_custom_call.1} parent=5 // pred_fallthru
        _
    $region6: #{tpu_custom_call.1} parent=1 // loop_footer
      %s23 = sadd.s32 1, %s19
    $region7: #{tpu_custom_call.1} parent=1 // loop_footer_branch
      %18 = sbr.rel target = $region3
    $region8: #{tpu_custom_call.1} parent=1 // loop_exit
      _
    %1101 = vsyncpa [#allocation4], 1
    %s1102 = scalar_lea.sflag [#allocation4], 1
    %1103 = vsyncpa %s1102, 1
    %1104 = vsyncpa [#allocation5], 1
    %s1105 = scalar_lea.sflag [#allocation5], 1
    %1106 = vsyncpa %s1105, 1

</llo_original>
